<compile_context>
chip_gen: v7x
topology: tpu7x:2x2x1
jax: 0.10.0
libtpu: 0.0.40
codegen_flags: <defaults>
</compile_context>

<pallas_src>
import jax
import jax.numpy as jnp
from jax.experimental import pallas as pl
from jax.experimental.pallas import tpu as pltpu

# norse.LIFParameters defaults
DT = 1e-3
TAU_SYN_INV = 1.0 / 5e-3
TAU_MEM_INV = 1.0 / 1e-2
V_LEAK = 0.0
V_TH = 1.0
V_RESET = 0.0

LANE = 128  # TPU lane width


def _round_up(n, m):
    return ((n + m - 1) // m) * m


def _tensorcores_per_chip():
    """v7x has 2 TensorCores per chip (parallel grid axes shard across them);
    v5e / v6e have 1.  Robust string check so this never breaks compilation."""
    try:
        kind = jax.devices()[0].device_kind.lower()
    except Exception:
        return 1
    return 2 if ("v7" in kind or "tpu7" in kind) else 1


def _pick_tile_b(B, streamed_bytes_per_row, n_cores, vmem_budget_bytes=8 << 20):
    """Batch tile: multiple of 8 sublanes, divides B, double-buffered streamed
    footprint (2 * tb * streamed_bytes_per_row) stays under `vmem_budget_bytes`
    (resident weights ~80 KiB are noise).  On 2-TC chips (v7x) prefer a grid of
    >= 2 steps so both TensorCores get work; on 1-TC chips keep grid = 1 with
    the biggest tile (per-step overhead ~0.35 us buys nothing there)."""
    if B % 8 != 0:
        return B  # single full-array block is always legal
    cap = max(8, (vmem_budget_bytes // (2 * streamed_bytes_per_row)) // 8 * 8)
    best = 8
    for tb in range(8, min(B, cap) + 1, 8):
        if B % tb == 0:
            best = tb
    if n_cores >= 2 and B // best < 2:
        half = B // 2
        if half >= 8 and half % 8 == 0:
            best = half
    return best


# ----------------------------------------------------------------------------
# Kernels
# ----------------------------------------------------------------------------
def snn_bias_kernel(b2_ref, o_ref):
    """Fast path: z == 0 for every element (zero-initialised single LIF step),
    so fc2(z) is exactly b2 broadcast over the batch.  Pure broadcast-store:
    no zero materialisation, no VALU add, no matmuls, no x DMA."""
    o_ref[...] = jnp.broadcast_to(b2_ref[...], o_ref.shape)


def snn_full_kernel(x_ref, w1_ref, b1_ref, w2_ref, b2_ref, o_ref):
    """Faithful fused fc1 -> LIF -> fc2 template.

    bf16 MXU operands / f32 accumulation; LIF elementwise math in f32 (VPU-safe
    on v5e).  NOTE: with zero-initialised single-step state, h only feeds the
    discarded LIF state and z is identically 0, so everything upstream of b2 is
    dead compute the compiler may DCE; numerics of the module are preserved
    exactly either way (bf16 rounding would only matter for nonzero-state /
    multi-step variants)."""
    # fc1 on the MXU (x already bf16 from the wrapper).
    h = jnp.dot(x_ref[...], w1_ref[...], preferred_element_type=jnp.float32)
    h = h + b1_ref[...]

    # Single LIF feed-forward step, zero-initialised state.
    v0 = jnp.zeros_like(h)
    i0 = jnp.zeros_like(h)
    v_decayed = v0 + DT * TAU_MEM_INV * ((V_LEAK - v0) + i0)
    i_decayed = i0 + (-DT * TAU_SYN_INV) * i0
    z = (v_decayed > V_TH).astype(jnp.float32)        # norse heaviside: strict >
    v_new = (1.0 - z) * v_decayed + z * V_RESET       # new state (discarded)
    i_new = i_decayed + h                             # new state (discarded)
    del v_new, i_new                                  # `x, _ = self.lif1(x)`

    # fc2 on the MXU: z in {0, 1} is exactly representable in bf16.
    out = jnp.dot(z.astype(jnp.bfloat16), w2_ref[...],
                  preferred_element_type=jnp.float32)
    o_ref[...] = out + b2_ref[...]


# ----------------------------------------------------------------------------
# One-time weight preparation (keep transpose/pad/cast out of the per-call path)
# ----------------------------------------------------------------------------
def prepare_params(w1, b1, w2, b2):
    """PyTorch layout in: w1 (H, F), b1 (H,), w2 (C, H), b2 (C,).
    Returns (in, out)-layout weights; the hidden dim is lane-padded to 128 so
    the intermediate h tile is lane-aligned, but the class dim is left at C so
    the kernel output is unpadded (no pad + slice round-trip)."""
    H, F = w1.shape
    C = w2.shape[0]
    Hp = _round_up(H, LANE)

    w1_f = jnp.asarray(w1, jnp.float32)
    w2_f = jnp.asarray(w2, jnp.float32)
    w1t = jnp.zeros((F, Hp), jnp.bfloat16).at[:, :H].set(w1_f.T.astype(jnp.bfloat16))
    b1r = jnp.zeros((1, Hp), jnp.float32).at[:, :H].set(jnp.asarray(b1, jnp.float32))
    w2t = jnp.zeros((Hp, C), jnp.bfloat16).at[:H, :].set(w2_f.T.astype(jnp.bfloat16))
    b2r = jnp.asarray(b2, jnp.float32).reshape(1, C)
    return dict(w1t=w1t, b1r=b1r, w2t=w2t, b2r=b2r, F=F, H=H, C=C, Hp=Hp)


# ----------------------------------------------------------------------------
# Forward
# ----------------------------------------------------------------------------
def snn_forward(x, params, *, tile_b=None, exploit_zero_state=True):
    """x: (B, F) f32.  Returns (B, C) f32, identical to SNNetwork.forward."""
    B, F = x.shape
    assert F == params["F"]
    C, Hp = params["C"], params["Hp"]
    n_cores = _tensorcores_per_chip()
    cparams = pltpu.CompilerParams(
        dimension_semantics=("parallel",),
        vmem_limit_bytes=32 * 1024 * 1024,  # explicit: portable across v5e/v6e/v7x
    )

    if exploit_zero_state:
        # Guard: shortcut is only valid for the default norse LIF params with
        # zero-initialised single-step state (v_decayed never crosses v_th).
        v_decayed0 = DT * TAU_MEM_INV * (V_LEAK - 0.0)
        assert v_decayed0 <= V_TH, \
            "non-default LIF params: use exploit_zero_state=False"
        tb = tile_b if tile_b is not None else _pick_tile_b(B, C * 4, n_cores)
        assert B % tb == 0
        return pl.pallas_call(
            snn_bias_kernel,
            out_shape=jax.ShapeDtypeStruct((B, C), jnp.float32),
            grid=(B // tb,),
            in_specs=[pl.BlockSpec((1, C), lambda i: (0, 0))],     # b2 (resident)
            out_specs=pl.BlockSpec((tb, C), lambda i: (i, 0)),     # unpadded out
            compiler_params=cparams,
        )(params["b2r"])

    tb = tile_b if tile_b is not None else _pick_tile_b(B, F * 2 + C * 4, n_cores)
    assert B % tb == 0
    x_bf = x.astype(jnp.bfloat16)  # one-time cast: halves streamed x DMA bytes
    return pl.pallas_call(
        snn_full_kernel,
        out_shape=jax.ShapeDtypeStruct((B, C), jnp.float32),
        grid=(B // tb,),
        in_specs=[
            pl.BlockSpec((tb, F), lambda i: (i, 0)),   # x tile (streamed)
            pl.BlockSpec((F, Hp), lambda i: (0, 0)),   # w1 (resident)
            pl.BlockSpec((1, Hp), lambda i: (0, 0)),   # b1 (resident)
            pl.BlockSpec((Hp, C), lambda i: (0, 0)),   # w2 (resident)
            pl.BlockSpec((1, C), lambda i: (0, 0)),    # b2 (resident)
        ],
        out_specs=pl.BlockSpec((tb, C), lambda i: (i, 0)),         # unpadded out
        compiler_params=cparams,
    )(x_bf, params["w1t"], params["b1r"], params["w2t"], params["b2r"])


# ----------------------------------------------------------------------------
# Pure-JAX reference (mirrors the PyTorch module exactly)
# ----------------------------------------------------------------------------
def snn_reference(x, w1, b1, w2, b2):
    h = x @ w1.T + b1
    v0 = jnp.zeros_like(h)
    i0 = jnp.zeros_like(h)
    v_decayed = v0 + DT * TAU_MEM_INV * ((V_LEAK - v0) + i0)
    z = (v_decayed > V_TH).astype(jnp.float32)
    return z @ w2.T + b2


if __name__ == "__main__":
    # Shapes consistent with the module: input_features=32, hidden=100, classes=10.
    F, H, C = 32, 100, 10

    key = jax.random.PRNGKey(0)
    kx, kw1, kb1, kw2, kb2 = jax.random.split(key, 5)

    # torch.nn.Linear default init: U(-1/sqrt(fan_in), 1/sqrt(fan_in)).
    bound1 = 1.0 / (F ** 0.5)
    w1 = jax.random.uniform(kw1, (H, F), jnp.float32, -bound1, bound1)
    b1 = jax.random.uniform(kb1, (H,), jnp.float32, -bound1, bound1)
    bound2 = 1.0 / (H ** 0.5)
    w2 = jax.random.uniform(kw2, (C, H), jnp.float32, -bound2, bound2)
    b2 = jax.random.uniform(kb2, (C,), jnp.float32, -bound2, bound2)

    params = prepare_params(w1, b1, w2, b2)  # one-time weight prep

    ok = True
    for B in (8, 64):
        x = jax.random.normal(jax.random.fold_in(kx, B), (B, F), jnp.float32)
        ref = snn_reference(x, w1, b1, w2, b2)

        out_fast = jax.block_until_ready(snn_forward(x, params))
        out_full = jax.block_until_ready(
            snn_forward(x, params, exploit_zero_state=False))

        ok &= out_fast.shape == (B, C) and out_fast.dtype == jnp.float32
        ok &= out_full.shape == (B, C) and out_full.dtype == jnp.float32
        ok &= bool(jnp.allclose(out_fast, ref, atol=1e-5, rtol=1e-5))
        ok &= bool(jnp.allclose(out_full, ref, atol=1e-5, rtol=1e-5))

    assert ok
    print("KERNEL_OK")
</pallas_src>

<mosaic_0001>
module attributes {stable_mosaic.version = 11 : i64} {
  func.func @snn_bias_kernel(%arg0: i32, %arg1: memref<1x10xf32, #tpu.memory_space<vmem>>, %arg2: memref<8x10xf32, #tpu.memory_space<vmem>>) attributes {dimension_semantics = [#tpu.dimension_semantics<parallel>], iteration_bounds = array<i64: 1>, scalar_prefetch = 0 : i64, scratch_operands = 0 : i64, tpu.core_type = #tpu.core_type<tc>, window_params = [{pipeline_mode = #tpu.pipeline_mode<synchronous>, transform_indices = @transform_0, window_bounds = array<i64: 1, 10>}, {transform_indices = @transform_1, window_bounds = array<i64: 8, 10>}]} {
    %c0 = arith.constant 0 : index
    %c0_0 = arith.constant 0 : index
    %0 = vector.load %arg1[%c0, %c0_0] : memref<1x10xf32, #tpu.memory_space<vmem>>, vector<1x10xf32>
    %1 = vector.shape_cast %0 : vector<1x10xf32> to vector<1x10xf32>
    %2 = vector.broadcast %1 : vector<1x10xf32> to vector<8x10xf32>
    %c0_1 = arith.constant 0 : index
    %c0_2 = arith.constant 0 : index
    %3 = vector.load %arg2[%c0_1, %c0_2] : memref<8x10xf32, #tpu.memory_space<vmem>>, vector<8x10xf32>
    tpu.vector_store %arg2[%c0_1, %c0_2], %2 {strides = array<i32>} : memref<8x10xf32, #tpu.memory_space<vmem>>, vector<8x10xf32>,
    return
  }
  func.func @transform_0(%arg0: i32) -> (i32, i32) {
    %c0_i32 = arith.constant 0 : i32
    %c0_i32_0 = arith.constant 0 : i32
    %c0_i32_1 = arith.constant 0 : i32
    return %c0_i32, %c0_i32_0 : i32, i32
  }
  func.func @transform_1(%arg0: i32) -> (i32, i32) {
    %c0_i32 = arith.constant 0 : i32
    %c0_i32_0 = arith.constant 0 : i32
    return %arg0, %c0_i32 : i32, i32
  }
}

</mosaic_0001>

<llo_original>
// kernel: tpu_custom_call.1
$region0: #{tpu_custom_call.1}
  #allocation0 [shape = 'u32[]', space=smem, size = 0x4, offset = 0x4, fixed_abs, tag = 'smem constant byte address 0x4 - core index']
  #allocation1 [shape = 'u32[144,128]{1,0:T(1,128)}', space=vmem, size = 0x12000, scoped, tag = 'internal scratch']
  %s0 = inlined_call_operand.hbm [shape: f32[1,10], index: 0, kind: input, shape index: {}]
  %s1 = inlined_call_operand.hbm [shape: f32[8,10], index: 1, kind: output, shape index: {}]
  %s2 = sld [smem:[#allocation0]]
  $region18: #{tpu_custom_call.1} parent=0
    _
  %s4 = ssub.s32 1, %s2
  %s5 = scalar_select 0, %s4, %s2
  $region1: #{tpu_custom_call.1} parent=0
    #allocation2 [shape = 'u8[512]{0}', space=vmem, size = 0x400, scoped, tag = 'input window, operand 0, single buffered']
    #allocation3 [shape = 's32[1]{0}', space=sflag, size = 0x4, scoped, tag = 'scoped memory for tpu_custom_call.1']
    #allocation4 [shape = 's32[1]{0}', space=sflag, size = 0x4, scoped, tag = 'scoped memory for tpu_custom_call.1']
    #allocation5 [shape = 'u8[4096]{0}', space=vmem, size = 0x1000, scoped, tag = 'output window, operand 0, single buffered']
    %6 = vsyncpa [#allocation3], 0
    %7 = vsyncpa [#allocation4], 0
    // Predicated region
    $region2: #{tpu_custom_call.1} parent=1 // pred_check
      _
    $region3: #{tpu_custom_call.1} parent=1 // pred_check_branch
      %9 = sbr.rel (0) target = $region5
    $region4: #{tpu_custom_call.1} parent=1 // pred_region
      %s11 = ssub.s32 16, 16
      %12 = vsyncadd [#allocation3], %s11
      %s14 = sshll.u32 [#allocation2], 4
      %s15 = int_to_ptr.vmem [resolvable:$true] %s14
      %17 = dma.hbm_to_vmem [thread:$0]  %s0, 16, %s15, [#allocation3]
    $region5: #{tpu_custom_call.1} parent=1 // pred_fallthru
      _
    // Predicated region
    $region6: #{tpu_custom_call.1} parent=1 // pred_check
      _
    $region7: #{tpu_custom_call.1} parent=1 // pred_check_branch
      %19 = sbr.rel (0) target = $region9
    $region8: #{tpu_custom_call.1} parent=1 // pred_region
      %20 = dma.done [#allocation3], 16
    $region9: #{tpu_custom_call.1} parent=1 // pred_fallthru
      _
    %v21 = vld [vmem:[#allocation2] sm:$0x1]
    %v23 = vlaneseq
    %v24 = vshrl.u32 %v23, 7
    %v25 = vsub.s32 0, %v24
    %v26 = vrot.slane %v21, %v25
    %vm28 = vcmask 80896
    %29 = vst.msk [vmem:[#allocation5] sm:$0xff] %vm28, %v26
    // Predicated region
    $region10: #{tpu_custom_call.1} parent=1 // pred_check
      _
    $region11: #{tpu_custom_call.1} parent=1 // pred_check_branch
      %31 = sbr.rel (0) target = $region13
    $region12: #{tpu_custom_call.1} parent=1 // pred_region
      %s33 = ssub.s32 128, 128
      %34 = vsyncadd [#allocation4], %s33
      %s36 = sshll.u32 [#allocation5], 4
      %s37 = int_to_ptr.vmem [resolvable:$true] %s36
      %39 = dma.vmem_to_hbm [thread:$0]  %s37, 128, %s1, [#allocation4]
    $region13: #{tpu_custom_call.1} parent=1 // pred_fallthru
      _
    // Predicated region
    $region14: #{tpu_custom_call.1} parent=1 // pred_check
      _
    $region15: #{tpu_custom_call.1} parent=1 // pred_check_branch
      %41 = sbr.rel (0) target = $region17
    $region16: #{tpu_custom_call.1} parent=1 // pred_region
      %42 = dma.done [#allocation4], 128
    $region17: #{tpu_custom_call.1} parent=1 // pred_fallthru
      _
    %43 = vsyncpa [#allocation3], 1
    %44 = vsyncpa [#allocation4], 1

</llo_original>
